<compile_context>
chip_gen: v7x
topology: tpu7x:2x2x1
jax: 0.10.0
libtpu: 0.0.40
codegen_flags: <defaults>
</compile_context>

<pallas_src>
import jax
import jax.numpy as jnp
from jax.experimental import pallas as pl
from jax.experimental.pallas import tpu as pltpu


def _backdoor_kernel(x_ref, one_minus_m_ref, m_t_ref, lo_ref, hi_ref, o_ref):
    # x_ref/o_ref: (TB, TL)    one_minus_m/m_t/lo/hi: (1, TL)  (broadcast over sublanes)
    blended = one_minus_m_ref[...] * x_ref[...] + m_t_ref[...]
    o_ref[...] = jnp.clip(blended, lo_ref[...], hi_ref[...])


def backdoor_forward(x, mask, trigger, clip_min_t, clip_max_t,
                     *, target_block_bytes=4 << 20, vmem_limit_bytes=48 << 20):
    """Backdoor forward pass with a Pallas TPU kernel.

    x:        (N, C, H, W) float32
    mask:     (C, H, W)    float32
    trigger:  (C, H, W)    float32
    clip_min_t / clip_max_t: (C, 1, 1) float32 (already normalized by mean/std)
    returns:  (N, C, H, W) float32
    """
    N, C, H, W = x.shape
    HW = H * W
    L = C * HW
    dtype = x.dtype
    itemsize = dtype.itemsize
    row_bytes = L * itemsize

    # Lane-dense 2D views / resident precomputes (hoisted out of the hot loop).
    x2 = x.reshape(N, L)
    one_minus_m = (1.0 - mask).reshape(1, L).astype(dtype)
    m_t = (mask * trigger).reshape(1, L).astype(dtype)
    lo = jnp.broadcast_to(clip_min_t.reshape(C, 1), (C, HW)).reshape(1, L).astype(dtype)
    hi = jnp.broadcast_to(clip_max_t.reshape(C, 1), (C, HW)).reshape(1, L).astype(dtype)

    if 8 * row_bytes <= target_block_bytes:
        # ---- Full-row blocks: tile only the batch (sublane) axis. ----
        tb = max(8, (target_block_bytes // row_bytes) // 8 * 8)
        if N > 8:
            # Keep >= 2 grid steps so v7x megacore can split the batch across its 2 TCs.
            tb = min(tb, pl.cdiv(pl.cdiv(N, 2), 8) * 8)
        tb = min(tb, max(8, pl.cdiv(N, 8) * 8))
        if N < tb:
            tb = N  # block == full batch extent -> no sublane-divisibility constraint
        grid = (pl.cdiv(N, tb),)
        in_specs = [
            pl.BlockSpec((tb, L), lambda i: (i, 0)),   # x: TB images per step
            pl.BlockSpec((1, L), lambda i: (0, 0)),    # (1 - mask), resident
            pl.BlockSpec((1, L), lambda i: (0, 0)),    # mask * trigger, resident
            pl.BlockSpec((1, L), lambda i: (0, 0)),    # lane-dense clip_min, resident
            pl.BlockSpec((1, L), lambda i: (0, 0)),    # lane-dense clip_max, resident
        ]
        out_specs = pl.BlockSpec((tb, L), lambda i: (i, 0))
        dim_sem = ("parallel",)
    else:
        # ---- Huge rows: also tile the lane axis so VMEM stays bounded. ----
        tb = 8 if N >= 8 else N
        tl = max(128, (target_block_bytes // (8 * itemsize)) // 128 * 128)
        tl = min(tl, pl.cdiv(L, 128) * 128)
        grid = (pl.cdiv(N, tb), pl.cdiv(L, tl))
        in_specs = [
            pl.BlockSpec((tb, tl), lambda i, j: (i, j)),
            pl.BlockSpec((1, tl), lambda i, j: (0, j)),
            pl.BlockSpec((1, tl), lambda i, j: (0, j)),
            pl.BlockSpec((1, tl), lambda i, j: (0, j)),
            pl.BlockSpec((1, tl), lambda i, j: (0, j)),
        ]
        out_specs = pl.BlockSpec((tb, tl), lambda i, j: (i, j))
        dim_sem = ("parallel", "parallel")

    out = pl.pallas_call(
        _backdoor_kernel,
        out_shape=jax.ShapeDtypeStruct((N, L), dtype),
        grid=grid,
        in_specs=in_specs,
        out_specs=out_specs,
        compiler_params=pltpu.CompilerParams(
            dimension_semantics=dim_sem,
            vmem_limit_bytes=vmem_limit_bytes),
    )(x2, one_minus_m, m_t, lo, hi)

    return out.reshape(N, C, H, W)


def normalize_clip_min_max(clip_min, clip_max, mean, std, channel_num):
    mean_t = jnp.asarray(mean, jnp.float32).reshape(channel_num, 1, 1)
    std_t = jnp.asarray(std, jnp.float32).reshape(channel_num, 1, 1)
    return (clip_min - mean_t) / std_t, (clip_max - mean_t) / std_t


if __name__ == "__main__":
    # Module config (synthetic, deterministic): shape = [C, H, W]
    C, H, W = 3, 16, 16
    N = 2
    mean = [0.4914, 0.4822, 0.4465]
    std = [0.2470, 0.2435, 0.2616]
    clip_min, clip_max = 0.0, 1.0

    key = jax.random.PRNGKey(0)
    k_mask, k_trig, k_x, k_x2 = jax.random.split(key, 4)

    # torch.rand(shape) -> uniform [0, 1)
    mask = jax.random.uniform(k_mask, (C, H, W), dtype=jnp.float32)
    trigger = jax.random.uniform(k_trig, (C, H, W), dtype=jnp.float32)
    x = jax.random.normal(k_x, (N, C, H, W), dtype=jnp.float32)

    cmin_t, cmax_t = normalize_clip_min_max(clip_min, clip_max, mean, std, C)

    out = backdoor_forward(x, mask, trigger, cmin_t, cmax_t)
    out = jax.block_until_ready(out)

    # Pure-JAX reference check (small batch, block == full batch extent)
    ref = jnp.clip((1.0 - mask) * x + mask * trigger,
                   cmin_t[None, ...], cmax_t[None, ...])
    assert out.shape == ref.shape
    assert jnp.allclose(out, ref, atol=1e-6), "mismatch vs reference"

    # Validate the ragged (masked) last-block path: N not a multiple of tb.
    N2 = 10
    x_big = jax.random.normal(k_x2, (N2, C, H, W), dtype=jnp.float32)
    out2 = jax.block_until_ready(
        backdoor_forward(x_big, mask, trigger, cmin_t, cmax_t))
    ref2 = jnp.clip((1.0 - mask) * x_big + mask * trigger,
                    cmin_t[None, ...], cmax_t[None, ...])
    assert jnp.allclose(out2, ref2, atol=1e-6), "mismatch vs reference (ragged block)"

    print("KERNEL_OK")
</pallas_src>

<mosaic_0001>
module attributes {stable_mosaic.version = 11 : i64} {
  func.func @_backdoor_kernel(%arg0: i32, %arg1: memref<2x768xf32, #tpu.memory_space<vmem>>, %arg2: memref<1x768xf32, #tpu.memory_space<vmem>>, %arg3: memref<1x768xf32, #tpu.memory_space<vmem>>, %arg4: memref<1x768xf32, #tpu.memory_space<vmem>>, %arg5: memref<1x768xf32, #tpu.memory_space<vmem>>, %arg6: memref<2x768xf32, #tpu.memory_space<vmem>>) attributes {dimension_semantics = [#tpu.dimension_semantics<parallel>], iteration_bounds = array<i64: 1>, scalar_prefetch = 0 : i64, scratch_operands = 0 : i64, tpu.core_type = #tpu.core_type<tc>, window_params = [{transform_indices = @transform_0, window_bounds = array<i64: 2, 768>}, {pipeline_mode = #tpu.pipeline_mode<synchronous>, transform_indices = @transform_1, window_bounds = array<i64: 1, 768>}, {pipeline_mode = #tpu.pipeline_mode<synchronous>, transform_indices = @transform_2, window_bounds = array<i64: 1, 768>}, {pipeline_mode = #tpu.pipeline_mode<synchronous>, transform_indices = @transform_3, window_bounds = array<i64: 1, 768>}, {pipeline_mode = #tpu.pipeline_mode<synchronous>, transform_indices = @transform_4, window_bounds = array<i64: 1, 768>}, {transform_indices = @transform_5, window_bounds = array<i64: 2, 768>}]} {
    %c0 = arith.constant 0 : index
    %c0_0 = arith.constant 0 : index
    %0 = vector.load %arg2[%c0, %c0_0] : memref<1x768xf32, #tpu.memory_space<vmem>>, vector<1x768xf32>
    %c0_1 = arith.constant 0 : index
    %c0_2 = arith.constant 0 : index
    %1 = vector.load %arg1[%c0_1, %c0_2] : memref<2x768xf32, #tpu.memory_space<vmem>>, vector<2x768xf32>
    %2 = vector.broadcast %0 : vector<1x768xf32> to vector<2x768xf32>
    %3 = arith.mulf %2, %1 : vector<2x768xf32>
    %c0_3 = arith.constant 0 : index
    %c0_4 = arith.constant 0 : index
    %4 = vector.load %arg3[%c0_3, %c0_4] : memref<1x768xf32, #tpu.memory_space<vmem>>, vector<1x768xf32>
    %5 = vector.broadcast %4 : vector<1x768xf32> to vector<2x768xf32>
    %6 = arith.addf %3, %5 : vector<2x768xf32>
    %c0_5 = arith.constant 0 : index
    %c0_6 = arith.constant 0 : index
    %7 = vector.load %arg4[%c0_5, %c0_6] : memref<1x768xf32, #tpu.memory_space<vmem>>, vector<1x768xf32>
    %c0_7 = arith.constant 0 : index
    %c0_8 = arith.constant 0 : index
    %8 = vector.load %arg5[%c0_7, %c0_8] : memref<1x768xf32, #tpu.memory_space<vmem>>, vector<1x768xf32>
    %9 = vector.broadcast %7 : vector<1x768xf32> to vector<2x768xf32>
    %10 = arith.maximumf %9, %6 : vector<2x768xf32>
    %11 = vector.broadcast %8 : vector<1x768xf32> to vector<2x768xf32>
    %12 = arith.minimumf %11, %10 : vector<2x768xf32>
    %c0_9 = arith.constant 0 : index
    %c0_10 = arith.constant 0 : index
    %13 = vector.load %arg6[%c0_9, %c0_10] : memref<2x768xf32, #tpu.memory_space<vmem>>, vector<2x768xf32>
    tpu.vector_store %arg6[%c0_9, %c0_10], %12 {strides = array<i32>} : memref<2x768xf32, #tpu.memory_space<vmem>>, vector<2x768xf32>,
    return
  }
  func.func @transform_0(%arg0: i32) -> (i32, i32) {
    %c0_i32 = arith.constant 0 : i32
    %c0_i32_0 = arith.constant 0 : i32
    return %arg0, %c0_i32 : i32, i32
  }
  func.func @transform_1(%arg0: i32) -> (i32, i32) {
    %c0_i32 = arith.constant 0 : i32
    %c0_i32_0 = arith.constant 0 : i32
    %c0_i32_1 = arith.constant 0 : i32
    return %c0_i32, %c0_i32_0 : i32, i32
  }
  func.func @transform_2(%arg0: i32) -> (i32, i32) {
    %c0_i32 = arith.constant 0 : i32
    %c0_i32_0 = arith.constant 0 : i32
    %c0_i32_1 = arith.constant 0 : i32
    return %c0_i32, %c0_i32_0 : i32, i32
  }
  func.func @transform_3(%arg0: i32) -> (i32, i32) {
    %c0_i32 = arith.constant 0 : i32
    %c0_i32_0 = arith.constant 0 : i32
    %c0_i32_1 = arith.constant 0 : i32
    return %c0_i32, %c0_i32_0 : i32, i32
  }
  func.func @transform_4(%arg0: i32) -> (i32, i32) {
    %c0_i32 = arith.constant 0 : i32
    %c0_i32_0 = arith.constant 0 : i32
    %c0_i32_1 = arith.constant 0 : i32
    return %c0_i32, %c0_i32_0 : i32, i32
  }
  func.func @transform_5(%arg0: i32) -> (i32, i32) {
    %c0_i32 = arith.constant 0 : i32
    %c0_i32_0 = arith.constant 0 : i32
    return %arg0, %c0_i32 : i32, i32
  }
}

</mosaic_0001>

<llo_original>
// kernel: tpu_custom_call.1
$region0: #{tpu_custom_call.1}
  #allocation0 [shape = 'u32[]', space=smem, size = 0x4, offset = 0x4, fixed_abs, tag = 'smem constant byte address 0x4 - core index']
  #allocation1 [shape = 'u32[144,128]{1,0:T(1,128)}', space=vmem, size = 0x12000, scoped, tag = 'internal scratch']
  %s0 = inlined_call_operand.hbm [shape: f32[2,768], index: 0, kind: input, shape index: {}]
  %s1 = inlined_call_operand.hbm [shape: f32[1,768], index: 1, kind: input, shape index: {}]
  %s2 = inlined_call_operand.vmem [shape: f32[1,768], index: 2, kind: input, shape index: {}]
  %s3 = inlined_call_operand.hbm [shape: f32[1,768], index: 3, kind: input, shape index: {}]
  %s4 = inlined_call_operand.vmem [shape: f32[1,768], index: 4, kind: input, shape index: {}]
  %s5 = inlined_call_operand.hbm [shape: f32[2,768], index: 5, kind: output, shape index: {}]
  %s6 = sld [smem:[#allocation0]]
  $region42: #{tpu_custom_call.1} parent=0
    _
  %s8 = ssub.s32 1, %s6
  %s9 = scalar_select 0, %s8, %s6
  $region1: #{tpu_custom_call.1} parent=0
    #allocation2 [shape = 'u8[6144]{0}', space=vmem, size = 0x1800, scoped, tag = 'input window, operand 0, single buffered']
    #allocation3 [shape = 's32[1]{0}', space=sflag, size = 0x4, scoped, tag = 'scoped memory for tpu_custom_call.1']
    #allocation4 [shape = 's32[1]{0}', space=sflag, size = 0x4, scoped, tag = 'scoped memory for tpu_custom_call.1']
    #allocation5 [shape = 'u8[3072]{0}', space=vmem, size = 0xc00, scoped, tag = 'input window, operand 1, single buffered']
    #allocation6 [shape = 's32[1]{0}', space=sflag, size = 0x4, scoped, tag = 'scoped memory for tpu_custom_call.1']
    #allocation7 [shape = 'u8[3072]{0}', space=vmem, size = 0xc00, scoped, tag = 'input window, operand 3, single buffered']
    #allocation8 [shape = 'u8[6144]{0}', space=vmem, size = 0x1800, scoped, tag = 'output window, operand 0, single buffered']
    %10 = vsyncpa [#allocation3], 0
    %11 = vsyncpa [#allocation6], 0
    %12 = vsyncpa [#allocation4], 0
    // Predicated region
    $region2: #{tpu_custom_call.1} parent=1 // pred_check
      _
    $region3: #{tpu_custom_call.1} parent=1 // pred_check_branch
      %14 = sbr.rel (0) target = $region5
    $region4: #{tpu_custom_call.1} parent=1 // pred_region
      %s16 = ssub.s32 192, 192
      %17 = vsyncadd [#allocation3], %s16
      %s19 = sshll.u32 [#allocation2], 4
      %s20 = int_to_ptr.vmem [resolvable:$true] %s19
      %22 = dma.hbm_to_vmem [thread:$0]  %s0, 192, %s20, [#allocation3]
    $region5: #{tpu_custom_call.1} parent=1 // pred_fallthru
      _
    // Predicated region
    $region6: #{tpu_custom_call.1} parent=1 // pred_check
      _
    $region7: #{tpu_custom_call.1} parent=1 // pred_check_branch
      %24 = sbr.rel (0) target = $region9
    $region8: #{tpu_custom_call.1} parent=1 // pred_region
      %s26 = ssub.s32 96, 96
      %27 = vsyncadd [#allocation6], %s26
      %s29 = sshll.u32 [#allocation5], 4
      %s30 = int_to_ptr.vmem [resolvable:$true] %s29
      %32 = dma.hbm_to_vmem [thread:$0]  %s1, 96, %s30, [#allocation6]
    $region9: #{tpu_custom_call.1} parent=1 // pred_fallthru
      _
    // Predicated region
    $region10: #{tpu_custom_call.1} parent=1 // pred_check
      _
    $region11: #{tpu_custom_call.1} parent=1 // pred_check_branch
      %34 = sbr.rel (0) target = $region13
    $region12: #{tpu_custom_call.1} parent=1 // pred_region
      _
    $region13: #{tpu_custom_call.1} parent=1 // pred_fallthru
      _
    // Predicated region
    $region14: #{tpu_custom_call.1} parent=1 // pred_check
      _
    $region15: #{tpu_custom_call.1} parent=1 // pred_check_branch
      %36 = sbr.rel (0) target = $region17
    $region16: #{tpu_custom_call.1} parent=1 // pred_region
      %s38 = ssub.s32 96, 96
      %39 = vsyncadd [#allocation6], %s38
      %s41 = sshll.u32 [#allocation7], 4
      %s42 = int_to_ptr.vmem [resolvable:$true] %s41
      %44 = dma.hbm_to_vmem [thread:$0]  %s3, 96, %s42, [#allocation6]
    $region17: #{tpu_custom_call.1} parent=1 // pred_fallthru
      _
    // Predicated region
    $region18: #{tpu_custom_call.1} parent=1 // pred_check
      _
    $region19: #{tpu_custom_call.1} parent=1 // pred_check_branch
      %46 = sbr.rel (0) target = $region21
    $region20: #{tpu_custom_call.1} parent=1 // pred_region
      _
    $region21: #{tpu_custom_call.1} parent=1 // pred_fallthru
      _
    // Predicated region
    $region22: #{tpu_custom_call.1} parent=1 // pred_check
      _
    $region23: #{tpu_custom_call.1} parent=1 // pred_check_branch
      %48 = sbr.rel (0) target = $region25
    $region24: #{tpu_custom_call.1} parent=1 // pred_region
      %49 = dma.done [#allocation3], 192
    $region25: #{tpu_custom_call.1} parent=1 // pred_fallthru
      _
    // Predicated region
    $region26: #{tpu_custom_call.1} parent=1 // pred_check
      _
    $region27: #{tpu_custom_call.1} parent=1 // pred_check_branch
      %51 = sbr.rel (0) target = $region29
    $region28: #{tpu_custom_call.1} parent=1 // pred_region
      %52 = dma.done [#allocation6], 96
    $region29: #{tpu_custom_call.1} parent=1 // pred_fallthru
      _
    // Predicated region
    $region30: #{tpu_custom_call.1} parent=1 // pred_check
      _
    $region31: #{tpu_custom_call.1} parent=1 // pred_check_branch
      %54 = sbr.rel (0) target = $region33
    $region32: #{tpu_custom_call.1} parent=1 // pred_region
      %55 = dma.done [#allocation6], 96
    $region33: #{tpu_custom_call.1} parent=1 // pred_fallthru
      _
    %v56 = vld [vmem:[#allocation5] sm:$0x3f]
    %v57 = vld [vmem:[#allocation2] sm:$0xff]
    %v58 = vld [vmem:[#allocation2 + $0x8] sm:$0xf]
    %v60 = vlaneseq
    %v61 = vshrl.u32 %v60, 7
    %v62 = vsub.s32 0, %v61
    %v63 = vrot.slane %v56, %v62
    %v64 = vlaneseq
    %v65 = vshrl.u32 %v64, 7
    %v66 = vsub.s32 1, %v65
    %v67 = vrot.slane %v56, %v66
    %v68 = vlaneseq
    %v69 = vshrl.u32 %v68, 7
    %v70 = vsub.s32 2, %v69
    %v71 = vrot.slane %v56, %v70
    %v72 = vlaneseq
    %v73 = vshrl.u32 %v72, 7
    %v74 = vsub.s32 3, %v73
    %v75 = vrot.slane %v56, %v74
    %v76 = vlaneseq
    %v77 = vshrl.u32 %v76, 7
    %v78 = vsub.s32 4, %v77
    %v79 = vrot.slane %v56, %v78
    %v80 = vlaneseq
    %v81 = vshrl.u32 %v80, 7
    %v82 = vsub.s32 5, %v81
    %v83 = vrot.slane %v56, %v82
    %v92 = vcombine.high %v57, %v57
    %v94 = vunpack.c.l.s4 1983009808
    %v95 = vunpack.c.0.s8 %v94
    %v96 = vlaneseq
    %v97 = vshrl.u32 %v96, 7
    %v98 = vsub.s32 %v95, %v97
    %v99 = vrot.slane %v57, %v98
    %v101 = vunpack.c.l.s4 1983009808
    %v102 = vunpack.c.0.s8 %v101
    %v103 = vlaneseq
    %v104 = vshrl.u32 %v103, 7
    %v105 = vsub.s32 %v102, %v104
    %v106 = vrot.slane %v92, %v105
    %v107 = vcombine.high %v99, %v99
    %v108 = vcombine.high %v106, %v106
    %v110 = vunpack.c.l.s4 1983009808
    %v111 = vunpack.c.0.s8 %v110
    %v112 = vlaneseq
    %v113 = vshrl.u32 %v112, 7
    %v114 = vsub.s32 %v111, %v113
    %v115 = vrot.slane %v58, %v114
    %v116 = vcombine.high %v115, %v115
    %v123 = vmul.f32 %v63, %v99
    %v124 = vmul.f32 %v67, %v107
    %v125 = vmul.f32 %v71, %v106
    %v126 = vmul.f32 %v75, %v108
    %v127 = vmul.f32 %v79, %v115
    %v128 = vmul.f32 %v83, %v116
    %v129 = vld [vmem:[%s2] sm:$0x3f]
    %v131 = vlaneseq
    %v132 = vshrl.u32 %v131, 7
    %v133 = vsub.s32 0, %v132
    %v134 = vrot.slane %v129, %v133
    %v135 = vlaneseq
    %v136 = vshrl.u32 %v135, 7
    %v137 = vsub.s32 1, %v136
    %v138 = vrot.slane %v129, %v137
    %v139 = vlaneseq
    %v140 = vshrl.u32 %v139, 7
    %v141 = vsub.s32 2, %v140
    %v142 = vrot.slane %v129, %v141
    %v143 = vlaneseq
    %v144 = vshrl.u32 %v143, 7
    %v145 = vsub.s32 3, %v144
    %v146 = vrot.slane %v129, %v145
    %v147 = vlaneseq
    %v148 = vshrl.u32 %v147, 7
    %v149 = vsub.s32 4, %v148
    %v150 = vrot.slane %v129, %v149
    %v151 = vlaneseq
    %v152 = vshrl.u32 %v151, 7
    %v153 = vsub.s32 5, %v152
    %v154 = vrot.slane %v129, %v153
    %v161 = vadd.f32 %v123, %v134
    %v162 = vadd.f32 %v124, %v138
    %v163 = vadd.f32 %v125, %v142
    %v164 = vadd.f32 %v126, %v146
    %v165 = vadd.f32 %v127, %v150
    %v166 = vadd.f32 %v128, %v154
    %v167 = vld [vmem:[#allocation7] sm:$0x3f]
    %v168 = vld [vmem:[%s4] sm:$0x3f]
    %v170 = vlaneseq
    %v171 = vshrl.u32 %v170, 7
    %v172 = vsub.s32 0, %v171
    %v173 = vrot.slane %v167, %v172
    %v174 = vlaneseq
    %v175 = vshrl.u32 %v174, 7
    %v176 = vsub.s32 1, %v175
    %v177 = vrot.slane %v167, %v176
    %v178 = vlaneseq
    %v179 = vshrl.u32 %v178, 7
    %v180 = vsub.s32 2, %v179
    %v181 = vrot.slane %v167, %v180
    %v182 = vlaneseq
    %v183 = vshrl.u32 %v182, 7
    %v184 = vsub.s32 3, %v183
    %v185 = vrot.slane %v167, %v184
    %v186 = vlaneseq
    %v187 = vshrl.u32 %v186, 7
    %v188 = vsub.s32 4, %v187
    %v189 = vrot.slane %v167, %v188
    %v190 = vlaneseq
    %v191 = vshrl.u32 %v190, 7
    %v192 = vsub.s32 5, %v191
    %v193 = vrot.slane %v167, %v192
    %v200 = vmax.f32 %v173, %v161
    %v201 = vmax.f32 %v177, %v162
    %v202 = vmax.f32 %v181, %v163
    %v203 = vmax.f32 %v185, %v164
    %v204 = vmax.f32 %v189, %v165
    %v205 = vmax.f32 %v193, %v166
    %v207 = vlaneseq
    %v208 = vshrl.u32 %v207, 7
    %v209 = vsub.s32 0, %v208
    %v210 = vrot.slane %v168, %v209
    %v211 = vlaneseq
    %v212 = vshrl.u32 %v211, 7
    %v213 = vsub.s32 1, %v212
    %v214 = vrot.slane %v168, %v213
    %v215 = vlaneseq
    %v216 = vshrl.u32 %v215, 7
    %v217 = vsub.s32 2, %v216
    %v218 = vrot.slane %v168, %v217
    %v219 = vlaneseq
    %v220 = vshrl.u32 %v219, 7
    %v221 = vsub.s32 3, %v220
    %v222 = vrot.slane %v168, %v221
    %v223 = vlaneseq
    %v224 = vshrl.u32 %v223, 7
    %v225 = vsub.s32 4, %v224
    %v226 = vrot.slane %v168, %v225
    %v227 = vlaneseq
    %v228 = vshrl.u32 %v227, 7
    %v229 = vsub.s32 5, %v228
    %v230 = vrot.slane %v168, %v229
    %v237 = vmin.f32 %v210, %v200
    %v238 = vmin.f32 %v214, %v201
    %v239 = vmin.f32 %v218, %v202
    %v240 = vmin.f32 %v222, %v203
    %v241 = vmin.f32 %v226, %v204
    %v242 = vmin.f32 %v230, %v205
    %v249 = vcombine.low %v237, %v238
    %v250 = vcombine.low %v239, %v240
    %v252 = vunpack.c.l.s4 1983009808
    %v253 = vunpack.c.0.s8 %v252
    %v254 = vlaneseq
    %v255 = vshrl.u32 %v254, 7
    %v256 = vsub.s32 %v253, %v255
    %v257 = vrot.slane %v249, %v256
    %v259 = vunpack.c.l.s4 1983009808
    %v260 = vunpack.c.0.s8 %v259
    %v261 = vlaneseq
    %v262 = vshrl.u32 %v261, 7
    %v263 = vsub.s32 %v260, %v262
    %v264 = vrot.slane %v250, %v263
    %v265 = vcombine.low %v257, %v264
    %v266 = vcombine.low %v241, %v242
    %v268 = vunpack.c.l.s4 1983009808
    %v269 = vunpack.c.0.s8 %v268
    %v270 = vlaneseq
    %v271 = vshrl.u32 %v270, 7
    %v272 = vsub.s32 %v269, %v271
    %v273 = vrot.slane %v266, %v272
    %276 = vst [vmem:[#allocation8] sm:$0xff] %v265
    %277 = vst [vmem:[#allocation8 + $0x8] sm:$0xf] %v273
    // Predicated region
    $region34: #{tpu_custom_call.1} parent=1 // pred_check
      _
    $region35: #{tpu_custom_call.1} parent=1 // pred_check_branch
      %279 = sbr.rel (0) target = $region37
    $region36: #{tpu_custom_call.1} parent=1 // pred_region
      %s281 = ssub.s32 192, 192
      %282 = vsyncadd [#allocation4], %s281
      %s284 = sshll.u32 [#allocation8], 4
      %s285 = int_to_ptr.vmem [resolvable:$true] %s284
      %287 = dma.vmem_to_hbm [thread:$0]  %s285, 192, %s5, [#allocation4]
    $region37: #{tpu_custom_call.1} parent=1 // pred_fallthru
      _
    // Predicated region
    $region38: #{tpu_custom_call.1} parent=1 // pred_check
      _
    $region39: #{tpu_custom_call.1} parent=1 // pred_check_branch
      %289 = sbr.rel (0) target = $region41
    $region40: #{tpu_custom_call.1} parent=1 // pred_region
      %290 = dma.done [#allocation4], 192
    $region41: #{tpu_custom_call.1} parent=1 // pred_fallthru
      _
    %291 = vsyncpa [#allocation3], 1
    %292 = vsyncpa [#allocation6], 1
    %293 = vsyncpa [#allocation4], 1

</llo_original>
